<compile_context>
chip_gen: v7x
topology: tpu7x:2x2x1
jax: 0.10.0
libtpu: 0.0.40
codegen_flags: <defaults>
</compile_context>

<pallas_src>
import functools

import jax
import jax.numpy as jnp
from jax.experimental import pallas as pl
from jax.experimental.pallas import tpu as pltpu

# ---- module-consistent small config --------------------------------------
B = 2            # batch
T = 16           # n_ctx (sequence length)
E = 32           # token_emb_dim
VOCAB = 100      # GloVe vocab size (stand-in for the .npy table)
PAD_ID = 0       # pad_token_id (embedding row zeroed, non-trainable)
LABEL_SIZE = 4   # number of classes
VP = 128         # vocab padded to lane width for the one-hot matmul
LP = 128         # lane-padded class width for a lane-dense output store
NEG_BIG = -1e30  # logit for padded classes -> softmax prob exactly 0


def make_kernel(b, t, e, vp, lp):
    bt = b * t

    def kernel(ids_ref, table_ref, w_ref, out_ref):
        # --- embedding lookup as one fused MXU matmul ----------------------
        # TODO(synk): at real GloVe vocab sizes keep the table in HBM
        # (memory_space=pl.ANY) and gather rows via scalar-prefetch DMA; the
        # one-hot matmul is only sensible for this toy 128-wide padded vocab.
        ids = ids_ref[...]                                         # [B*T, 1] int32
        vocab_iota = jax.lax.broadcasted_iota(jnp.int32, (bt, vp), 1)
        onehot = (vocab_iota == ids).astype(jnp.float32)           # [B*T, Vp]
        emb = jnp.dot(onehot, table_ref[...],
                      preferred_element_type=jnp.float32)          # [B*T, E]
        # nn.Dropout is identity at inference -> omitted.

        # --- max over sequence: pairwise VPU fold, 8-aligned slices ---------
        rows = []
        for i in range(b):
            blk = emb[i * t:(i + 1) * t, :]                        # [T, E]
            n = t
            while n > 8 and n % 2 == 0:
                h = n // 2
                blk = jnp.maximum(blk[:h, :], blk[h:n, :])         # fold halves
                n = h
            rows.append(jnp.max(blk[:n, :], axis=0, keepdims=True))
        xmax = jnp.concatenate(rows, axis=0)                       # [B, E]

        # --- Gaussian Naive Bayes as ONE fused lane-dense matmul ------------
        # ll[b,c] = x @ (m/v) + x^2 @ (-1/(2v)) + const
        #         = [x | x^2] @ W  + const_row   (const packed at slab row 2E)
        x2 = jnp.concatenate([xmax, xmax * xmax], axis=-1)         # [B, 2E]
        logits = (jnp.dot(x2, w_ref[0:2 * e, :],
                          preferred_element_type=jnp.float32)
                  + w_ref[2 * e:2 * e + 1, :])                     # [B, LP]

        # --- softmax over classes (padded lanes carry -1e30 -> prob 0) -----
        m = jnp.max(logits, axis=-1, keepdims=True)
        ex = jnp.exp(logits - m)
        out_ref[...] = ex / jnp.sum(ex, axis=-1, keepdims=True)

    return kernel


def pack_textglovegnb_params(embed_table, means, variances, class_priors):
    """One-time host-side packing of the model constants (hoisted off the call path).

    Returns:
      table_p: [VP, E] f32  vocab-padded embedding table
      w_slab : [2E+8, LP] f32  rows [0:E]=m/|v| (T), [E:2E]=-1/(2|v|) (T),
               row 2E = per-class additive constant (padded lanes = -1e30).
    """
    v_dim, e_dim = embed_table.shape
    c_dim = class_priors.shape[0]

    var_abs = jnp.abs(variances).astype(jnp.float32)               # [C, E]
    w1 = (means / var_abs).T                                       # [E, C]
    w2 = (-0.5 / var_abs).T                                        # [E, C]
    const = (jnp.sum(-0.5 * jnp.log(2.0 * jnp.pi * var_abs)
                     - means * means / (2.0 * var_abs), axis=-1)
             + jnp.log(class_priors)).astype(jnp.float32)          # [C]

    w_slab = jnp.zeros((2 * e_dim + 8, LP), jnp.float32)
    w_slab = w_slab.at[:e_dim, :c_dim].set(w1)
    w_slab = w_slab.at[e_dim:2 * e_dim, :c_dim].set(w2)
    w_slab = w_slab.at[2 * e_dim, :].set(NEG_BIG)
    w_slab = w_slab.at[2 * e_dim, :c_dim].set(const)

    table_p = jnp.zeros((VP, e_dim), jnp.float32).at[:v_dim].set(
        embed_table.astype(jnp.float32))
    return table_p, w_slab


def _forward_padded(x_ids, table_p, w_slab):
    """Runs the kernel; returns the lane-padded [B, LP] softmax block."""
    bsz, seq = x_ids.shape
    vp, e_dim = table_p.shape
    ids2d = x_ids.reshape(-1, 1).astype(jnp.int32)                 # [B*T, 1]
    return pl.pallas_call(
        make_kernel(bsz, seq, e_dim, vp, LP),
        out_shape=jax.ShapeDtypeStruct((bsz, LP), jnp.float32),
        in_specs=[pl.BlockSpec(memory_space=pltpu.MemorySpace.VMEM)] * 3,
        out_specs=pl.BlockSpec(memory_space=pltpu.MemorySpace.VMEM),
    )(ids2d, table_p, w_slab)


@functools.partial(jax.jit, static_argnums=3)
def textglovegnb_pallas(x_ids, table_p, w_slab, c_dim):
    """x_ids: [B, T] int32; packed params from pack_textglovegnb_params."""
    return _forward_padded(x_ids, table_p, w_slab)[:, :c_dim]      # [B, C]


def textglovegnb_ref(x_ids, embed_table, means, variances, class_priors):
    """Pure-JAX reference mirroring the PyTorch forward literally."""
    emb = embed_table[x_ids]                                       # [B, T, E]
    xmax = jnp.max(emb, axis=1)                                    # [B, E]
    v = jnp.abs(variances)
    xb = xmax[:, None, :]                                          # [B, 1, E]
    ll = jnp.sum(-0.5 * jnp.log(2.0 * jnp.pi * v) - (xb - means) ** 2 / v / 2.0,
                 axis=-1) + jnp.log(class_priors)                  # [B, C]
    return jax.nn.softmax(ll, axis=-1)


if __name__ == "__main__":
    root = jax.random.PRNGKey(0)
    k_ids, k_tab, k_m, k_v, k_s, k_p = jax.random.split(root, 6)

    # TODO(synk): load_embedding/load_label read files; replaced here by a
    # deterministic in-script GloVe-like table and fixed label count.
    embed_table = 0.3 * jax.random.normal(k_tab, (VOCAB, E), jnp.float32)
    embed_table = embed_table.at[PAD_ID].set(0.0)   # padding_idx row is zero

    # GNB parameters (module init uses eye/ones/uniform; random values here
    # exercise the abs(variance) and prior paths more thoroughly).
    means = 0.5 * jax.random.normal(k_m, (LABEL_SIZE, E), jnp.float32)
    variances = (jax.random.uniform(k_v, (LABEL_SIZE, E), jnp.float32, 0.5, 1.5)
                 * jnp.where(jax.random.bernoulli(k_s, 0.5, (LABEL_SIZE, E)),
                             1.0, -1.0))
    class_priors = jax.random.uniform(k_p, (LABEL_SIZE,), jnp.float32, 0.05, 1.0)

    x_ids = jax.random.randint(k_ids, (B, T), 0, VOCAB, jnp.int32)

    # Pack model constants ONCE (hoisted off the per-call path).
    table_p, w_slab = pack_textglovegnb_params(embed_table, means, variances,
                                               class_priors)
    table_p, w_slab = jax.block_until_ready((table_p, w_slab))

    out = textglovegnb_pallas(x_ids, table_p, w_slab, LABEL_SIZE)
    out = jax.block_until_ready(out)
    ref = textglovegnb_ref(x_ids, embed_table, means, variances, class_priors)

    assert out.shape == (B, LABEL_SIZE)
    assert jnp.allclose(jnp.sum(out, axis=-1), 1.0, atol=1e-5)
    assert jnp.allclose(out, ref, atol=1e-4, rtol=1e-4)
    print("KERNEL_OK")
</pallas_src>

<mosaic_0001>
module attributes {stable_mosaic.version = 11 : i64} {
  func.func @kernel(%arg0: memref<32x1xi32, #tpu.memory_space<vmem>>, %arg1: memref<128x32xf32, #tpu.memory_space<vmem>>, %arg2: memref<72x128xf32, #tpu.memory_space<vmem>>, %arg3: memref<2x128xf32, #tpu.memory_space<vmem>>) attributes {dimension_semantics = [], scalar_prefetch = 0 : i64, scratch_operands = 0 : i64, tpu.core_type = #tpu.core_type<tc>} {
    %c0 = arith.constant 0 : index
    %c0_0 = arith.constant 0 : index
    %0 = vector.load %arg0[%c0, %c0_0] : memref<32x1xi32, #tpu.memory_space<vmem>>, vector<32x1xi32>
    %1 = tpu.iota {dimensions = array<i32: 1>} : vector<32x128xi32>
    %2 = vector.broadcast %0 : vector<32x1xi32> to vector<32x128xi32>
    %3 = arith.cmpi eq, %1, %2 : vector<32x128xi32>
    %4 = arith.extui %3 : vector<32x128xi1> to vector<32x128xi32>
    %5 = arith.sitofp %4 : vector<32x128xi32> to vector<32x128xf32>
    %c0_1 = arith.constant 0 : index
    %c0_2 = arith.constant 0 : index
    %6 = vector.load %arg1[%c0_1, %c0_2] : memref<128x32xf32, #tpu.memory_space<vmem>>, vector<128x32xf32>
    %cst = arith.constant dense<0.000000e+00> : vector<32x32xf32>
    %7 = tpu.matmul %5, %6, %cst {dimension_numbers = #tpu.dot_dimension_numbers<[1], [0], [0], [1], [0, 0, 1, 1], [], []>} : vector<32x128xf32>, vector<128x32xf32>, vector<32x32xf32> -> vector<32x32xf32>
    %8 = vector.extract_strided_slice %7 {offsets = [0, 0], sizes = [16, 32], strides = [1, 1]} : vector<32x32xf32> to vector<16x32xf32>
    %9 = vector.extract_strided_slice %8 {offsets = [0, 0], sizes = [8, 32], strides = [1, 1]} : vector<16x32xf32> to vector<8x32xf32>
    %10 = vector.extract_strided_slice %8 {offsets = [8, 0], sizes = [8, 32], strides = [1, 1]} : vector<16x32xf32> to vector<8x32xf32>
    %11 = arith.maximumf %9, %10 : vector<8x32xf32>
    %cst_3 = arith.constant dense<0xFF800000> : vector<32xf32>
    %12 = vector.multi_reduction <maximumf>, %11, %cst_3 [0] : vector<8x32xf32> to vector<32xf32>
    %13 = vector.shape_cast %12 : vector<32xf32> to vector<1x32xf32>
    %14 = vector.extract_strided_slice %7 {offsets = [16, 0], sizes = [16, 32], strides = [1, 1]} : vector<32x32xf32> to vector<16x32xf32>
    %15 = vector.extract_strided_slice %14 {offsets = [0, 0], sizes = [8, 32], strides = [1, 1]} : vector<16x32xf32> to vector<8x32xf32>
    %16 = vector.extract_strided_slice %14 {offsets = [8, 0], sizes = [8, 32], strides = [1, 1]} : vector<16x32xf32> to vector<8x32xf32>
    %17 = arith.maximumf %15, %16 : vector<8x32xf32>
    %cst_4 = arith.constant dense<0xFF800000> : vector<32xf32>
    %18 = vector.multi_reduction <maximumf>, %17, %cst_4 [0] : vector<8x32xf32> to vector<32xf32>
    %19 = vector.shape_cast %18 : vector<32xf32> to vector<1x32xf32>
    %20 = tpu.concatenate %13, %19 in 0 : vector<1x32xf32>, vector<1x32xf32> -> vector<2x32xf32>
    %21 = arith.mulf %20, %20 : vector<2x32xf32>
    %22 = tpu.concatenate %20, %21 in 1 : vector<2x32xf32>, vector<2x32xf32> -> vector<2x64xf32>
    %c0_5 = arith.constant 0 : index
    %c0_6 = arith.constant 0 : index
    %23 = vector.load %arg2[%c0_5, %c0_6] : memref<72x128xf32, #tpu.memory_space<vmem>>, vector<64x128xf32>
    %cst_7 = arith.constant dense<0.000000e+00> : vector<2x128xf32>
    %24 = tpu.matmul %22, %23, %cst_7 {dimension_numbers = #tpu.dot_dimension_numbers<[1], [0], [0], [1], [0, 0, 1, 1], [], []>} : vector<2x64xf32>, vector<64x128xf32>, vector<2x128xf32> -> vector<2x128xf32>
    %c64 = arith.constant 64 : index
    %c0_8 = arith.constant 0 : index
    %25 = vector.load %arg2[%c64, %c0_8] : memref<72x128xf32, #tpu.memory_space<vmem>>, vector<1x128xf32>
    %26 = vector.broadcast %25 : vector<1x128xf32> to vector<2x128xf32>
    %27 = arith.addf %24, %26 : vector<2x128xf32>
    %cst_9 = arith.constant dense<0xFF800000> : vector<2xf32>
    %28 = vector.multi_reduction <maximumf>, %27, %cst_9 [1] : vector<2x128xf32> to vector<2xf32>
    %29 = vector.shape_cast %28 : vector<2xf32> to vector<2x1xf32>
    %30 = vector.broadcast %29 : vector<2x1xf32> to vector<2x128xf32>
    %31 = arith.subf %27, %30 : vector<2x128xf32>
    %32 = math.exp %31 : vector<2x128xf32>
    %cst_10 = arith.constant dense<0.000000e+00> : vector<2xf32>
    %33 = vector.multi_reduction <add>, %32, %cst_10 [1] : vector<2x128xf32> to vector<2xf32>
    %34 = vector.shape_cast %33 : vector<2xf32> to vector<2x1xf32>
    %35 = vector.broadcast %34 : vector<2x1xf32> to vector<2x128xf32>
    %36 = arith.divf %32, %35 : vector<2x128xf32>
    %c0_11 = arith.constant 0 : index
    %c0_12 = arith.constant 0 : index
    %37 = vector.load %arg3[%c0_11, %c0_12] : memref<2x128xf32, #tpu.memory_space<vmem>>, vector<2x128xf32>
    tpu.vector_store %arg3[%c0_11, %c0_12], %36 {strides = array<i32>} : memref<2x128xf32, #tpu.memory_space<vmem>>, vector<2x128xf32>,
    return
  }
}

</mosaic_0001>

<llo_original>
// kernel: textglovegnb_pallas.1
$region0: #{textglovegnb_pallas.1}
  #allocation0 [shape = 'u32[]', space=smem, size = 0x4, offset = 0x4, fixed_abs, tag = 'smem constant byte address 0x4 - core index']
  #allocation1 [shape = 'u32[144,128]{1,0:T(1,128)}', space=vmem, size = 0x12000, scoped, tag = 'internal scratch']
  %s0 = inlined_call_operand.vmem [shape: s32[32,1], index: 0, kind: input, shape index: {}]
  %s1 = inlined_call_operand.vmem [shape: f32[128,32], index: 1, kind: input, shape index: {}]
  %s2 = inlined_call_operand.vmem [shape: f32[72,128], index: 2, kind: input, shape index: {}]
  %s3 = inlined_call_operand.hbm [shape: f32[2,128], index: 3, kind: output, shape index: {}]
  %s4 = sld [smem:[#allocation0]]
  $region22: #{textglovegnb_pallas.1} parent=0
    _
  %s6 = ssub.s32 1, %s4
  %s7 = scalar_select 0, %s6, %s4
  $region1: #{textglovegnb_pallas.1} parent=0
    #allocation2 [shape = 'u8[1024]{0}', space=vmem, size = 0x400, scoped, tag = 'output window, operand 0, single buffered']
    #allocation3 [shape = 's32[1]{0}', space=sflag, size = 0x4, scoped, tag = 'scoped memory for textglovegnb_pallas.1']
    %8 = vsyncpa [#allocation3], 0
    // Predicated region
    $region2: #{textglovegnb_pallas.1} parent=1 // pred_check
      _
    $region3: #{textglovegnb_pallas.1} parent=1 // pred_check_branch
      %10 = sbr.rel (0) target = $region5
    $region4: #{textglovegnb_pallas.1} parent=1 // pred_region
      _
    $region5: #{textglovegnb_pallas.1} parent=1 // pred_fallthru
      _
    // Predicated region
    $region6: #{textglovegnb_pallas.1} parent=1 // pred_check
      _
    $region7: #{textglovegnb_pallas.1} parent=1 // pred_check_branch
      %12 = sbr.rel (0) target = $region9
    $region8: #{textglovegnb_pallas.1} parent=1 // pred_region
      _
    $region9: #{textglovegnb_pallas.1} parent=1 // pred_fallthru
      _
    // Predicated region
    $region10: #{textglovegnb_pallas.1} parent=1 // pred_check
      _
    $region11: #{textglovegnb_pallas.1} parent=1 // pred_check_branch
      %14 = sbr.rel (0) target = $region13
    $region12: #{textglovegnb_pallas.1} parent=1 // pred_region
      _
    $region13: #{textglovegnb_pallas.1} parent=1 // pred_fallthru
      _
    %v15 = vld [vmem:[%s0] sm:$0xff]
    %v16 = vld [vmem:[%s0 + $0x8] sm:$0xff]
    %v17 = vld [vmem:[%s0 + $0x10] sm:$0xff]
    %v18 = vld [vmem:[%s0 + $0x18] sm:$0xff]
    %v19 = vlaneseq
    %v20 = vand.u32 %v19, 127
    %21 = vset.pattern.permute.xlu0 0
    %22 = vperm.xlu0 %21, %v15
    %v23 = vpop.permute.xlu0 %22
    %24 = vset.pattern.permute.xlu0 0
    %25 = vperm.xlu0 %24, %v16
    %v26 = vpop.permute.xlu0 %25
    %27 = vset.pattern.permute.xlu0 0
    %28 = vperm.xlu0 %27, %v17
    %v29 = vpop.permute.xlu0 %28
    %30 = vset.pattern.permute.xlu0 0
    %31 = vperm.xlu0 %30, %v18
    %v32 = vpop.permute.xlu0 %31
    %vm33 = vcmp.eq.s32.totalorder %v20, %v23
    %vm34 = vcmp.eq.s32.totalorder %v20, %v26
    %vm35 = vcmp.eq.s32.totalorder %v20, %v29
    %vm36 = vcmp.eq.s32.totalorder %v20, %v32
    %v37 = vsel %vm33, 1, 0
    %v38 = vsel %vm34, 1, 0
    %v39 = vsel %vm35, 1, 0
    %v40 = vsel %vm36, 1, 0
    %v41 = vcvt.s32.f32 %v37
    %v42 = vcvt.s32.f32 %v38
    %v43 = vcvt.s32.f32 %v39
    %v44 = vcvt.s32.f32 %v40
    %v45 = vld [vmem:[%s1] sm:$0xff]
    %v46 = vld [vmem:[%s1 + $0x8] sm:$0xff]
    %v47 = vld [vmem:[%s1 + $0x10] sm:$0xff]
    %v48 = vld [vmem:[%s1 + $0x18] sm:$0xff]
    %v49 = vld [vmem:[%s1 + $0x20] sm:$0xff]
    %v50 = vld [vmem:[%s1 + $0x28] sm:$0xff]
    %v51 = vld [vmem:[%s1 + $0x30] sm:$0xff]
    %v52 = vld [vmem:[%s1 + $0x38] sm:$0xff]
    %v53 = vld [vmem:[%s1 + $0x40] sm:$0xff]
    %v54 = vld [vmem:[%s1 + $0x48] sm:$0xff]
    %v55 = vld [vmem:[%s1 + $0x50] sm:$0xff]
    %v56 = vld [vmem:[%s1 + $0x58] sm:$0xff]
    %v57 = vld [vmem:[%s1 + $0x60] sm:$0xff]
    %v58 = vld [vmem:[%s1 + $0x68] sm:$0xff]
    %v59 = vld [vmem:[%s1 + $0x70] sm:$0xff]
    %v60 = vld [vmem:[%s1 + $0x78] sm:$0xff]
    %61 = vmatprep.subr.mxu0 0.0
    %62 = vmatpush1.msra.mxu0 %v45
    %63 = vmatprep.subr.mxu0 0.0
    %64 = vmatpush1.msra.mxu0 %v46
    %65 = vmatprep.subr.mxu0 0.0
    %66 = vmatpush1.msra.mxu0 %v47
    %67 = vmatprep.subr.mxu0 0.0
    %68 = vmatpush1.msra.mxu0 %v48
    %69 = vmatprep.subr.mxu0 0.0
    %70 = vmatpush1.msra.mxu0 %v49
    %71 = vmatprep.subr.mxu0 0.0
    %72 = vmatpush1.msra.mxu0 %v50
    %73 = vmatprep.subr.mxu0 0.0
    %74 = vmatpush1.msra.mxu0 %v51
    %75 = vmatprep.subr.mxu0 0.0
    %76 = vmatpush1.msra.mxu0 %v52
    %77 = vmatprep.subr.mxu0 0.0
    %78 = vmatpush1.msra.mxu0 %v53
    %79 = vmatprep.subr.mxu0 0.0
    %80 = vmatpush1.msra.mxu0 %v54
    %81 = vmatprep.subr.mxu0 0.0
    %82 = vmatpush1.msra.mxu0 %v55
    %83 = vmatprep.subr.mxu0 0.0
    %84 = vmatpush1.msra.mxu0 %v56
    %85 = vmatprep.subr.mxu0 0.0
    %86 = vmatpush1.msra.mxu0 %v57
    %87 = vmatprep.subr.mxu0 0.0
    %88 = vmatpush1.msra.mxu0 %v58
    %89 = vmatprep.subr.mxu0 0.0
    %90 = vmatpush1.msra.mxu0 %v59
    %91 = vmatprep.subr.mxu0 0.0
    %92 = vmatpush1.msra.mxu0 %v60
    %93 = vmatprep.subr.mxu0 0.0
    %94 = vmatpush1.msra.mxu0 0.0
    %95 = vmatprep.subr.mxu0 0.0
    %96 = vmatpush1.msra.mxu0 0.0
    %97 = vmatprep.subr.mxu0 0.0
    %98 = vmatpush1.msra.mxu0 0.0
    %99 = vmatprep.subr.mxu0 0.0
    %100 = vmatpush1.msra.mxu0 0.0
    %101 = vmatprep.subr.mxu0 0.0
    %102 = vmatpush1.msra.mxu0 0.0
    %103 = vmatprep.subr.mxu0 0.0
    %104 = vmatpush1.msra.mxu0 0.0
    %105 = vmatprep.subr.mxu0 0.0
    %106 = vmatpush1.msra.mxu0 0.0
    %107 = vmatprep.subr.mxu0 0.0
    %108 = vmatpush1.msra.mxu0 0.0
    %109 = vmatprep.subr.mxu0 0.0
    %110 = vmatpush1.msra.mxu0 0.0
    %111 = vmatprep.subr.mxu0 0.0
    %112 = vmatpush1.msra.mxu0 0.0
    %113 = vmatprep.subr.mxu0 0.0
    %114 = vmatpush1.msra.mxu0 0.0
    %115 = vmatprep.subr.mxu0 0.0
    %116 = vmatpush1.msra.mxu0 0.0
    %117 = vmatprep.subr.mxu0 0.0
    %118 = vmatpush1.msra.mxu0 0.0
    %119 = vmatprep.subr.mxu0 0.0
    %120 = vmatpush1.msra.mxu0 0.0
    %121 = vmatprep.subr.mxu0 0.0
    %122 = vmatpush1.msra.mxu0 0.0
    %123 = vmatprep.subr.mxu0 0.0
    %124 = vmatpush1.msra.mxu0 0.0
    %125 = vmatprep.mubr.f32.mxu0 0.0
    %126 = vmatmul.mubr.f32.gmra.mrb[0].mxu0 %v41
    %v127 = vpop.f32.mrb[0].mxu0
    %v128 = vadd.f32 0.0, %v127
    %v129 = vpop.f32.mrb[0].mxu0
    %130 = vmatprep.mubr.f32.mxu0 0.0
    %131 = vmatmul.mubr.f32.gmra.mrb[0].mxu0 %v42
    %v132 = vpop.f32.mrb[0].mxu0
    %v133 = vadd.f32 0.0, %v132
    %v134 = vpop.f32.mrb[0].mxu0
    %135 = vmatprep.mubr.f32.mxu0 0.0
    %136 = vmatmul.mubr.f32.gmra.mrb[0].mxu0 %v43
    %v137 = vpop.f32.mrb[0].mxu0
    %v138 = vadd.f32 0.0, %v137
    %v139 = vpop.f32.mrb[0].mxu0
    %140 = vmatprep.mubr.f32.mxu0 0.0
    %141 = vmatmul.mubr.f32.gmra.mrb[0].mxu0 %v44
    %v142 = vpop.f32.mrb[0].mxu0
    %v143 = vadd.f32 0.0, %v142
    %v144 = vpop.f32.mrb[0].mxu0
    %145 = vdwg.mxu0
    %v146 = vmax.f32 %v128, %v133
    %vm147 = vcmask 261120
    %v148 = vsel %vm147, %v146, -inf
    %v149 = vrot.slane %v148, 4
    %v150 = vmax.f32 %v148, %v149
    %v151 = vrot.slane %v150, 2
    %v152 = vmax.f32 %v150, %v151
    %v153 = vrot.slane %v152, 1
    %v154 = vmax.f32 %v152, %v153
    %v155 = vmax.f32 %v138, %v143
    %v156 = vsel %vm147, %v155, -inf
    %v157 = vrot.slane %v156, 4
    %v158 = vmax.f32 %v156, %v157
    %v159 = vrot.slane %v158, 2
    %v160 = vmax.f32 %v158, %v159
    %v161 = vrot.slane %v160, 1
    %v162 = vmax.f32 %v160, %v161
    %vm163 = vcmask 1040384
    %v164 = vsel %vm163, %v154, %v162
    %v165 = vmul.f32 %v164, %v164
    %167 = vrot.lane.b32.xlu0 %v165, 32
    %v168 = vpop.permute.xlu0 %167
    %v170 = vsel %vm147, %v164, %v168
    %v171 = vld [vmem:[%s2] sm:$0xff]
    %v172 = vld [vmem:[%s2 + $0x8] sm:$0xff]
    %v173 = vld [vmem:[%s2 + $0x10] sm:$0xff]
    %v174 = vld [vmem:[%s2 + $0x18] sm:$0xff]
    %v175 = vld [vmem:[%s2 + $0x20] sm:$0xff]
    %v176 = vld [vmem:[%s2 + $0x28] sm:$0xff]
    %v177 = vld [vmem:[%s2 + $0x30] sm:$0xff]
    %v178 = vld [vmem:[%s2 + $0x38] sm:$0xff]
    %v179 = vld [vmem:[%s2 + $0x40] sm:$0x1]
    %v180 = vlaneseq
    %v181 = vshrl.u32 %v180, 7
    %v182 = vsub.s32 0, %v181
    %v183 = vrot.slane %v179, %v182
    %vm184 = vcmask 523264
    %v186 = vsel %vm184, %v170, 0
    %188 = vmatprep.subr.mxu0 0.0
    %189 = vmatpush1.msra.mxu0 %v171
    %190 = vmatprep.subr.mxu0 0.0
    %191 = vmatpush1.msra.mxu0 %v172
    %192 = vmatprep.subr.mxu0 0.0
    %193 = vmatpush1.msra.mxu0 %v173
    %194 = vmatprep.subr.mxu0 0.0
    %195 = vmatpush1.msra.mxu0 %v174
    %196 = vmatprep.subr.mxu0 0.0
    %197 = vmatpush1.msra.mxu0 %v175
    %198 = vmatprep.subr.mxu0 0.0
    %199 = vmatpush1.msra.mxu0 %v176
    %200 = vmatprep.subr.mxu0 0.0
    %201 = vmatpush1.msra.mxu0 %v177
    %202 = vmatprep.subr.mxu0 0.0
    %203 = vmatpush1.msra.mxu0 %v178
    %204 = vmatprep.subr.mxu0 0.0
    %205 = vmatpush1.msra.mxu0 0.0
    %206 = vmatprep.subr.mxu0 0.0
    %207 = vmatpush1.msra.mxu0 0.0
    %208 = vmatprep.subr.mxu0 0.0
    %209 = vmatpush1.msra.mxu0 0.0
    %210 = vmatprep.subr.mxu0 0.0
    %211 = vmatpush1.msra.mxu0 0.0
    %212 = vmatprep.subr.mxu0 0.0
    %213 = vmatpush1.msra.mxu0 0.0
    %214 = vmatprep.subr.mxu0 0.0
    %215 = vmatpush1.msra.mxu0 0.0
    %216 = vmatprep.subr.mxu0 0.0
    %217 = vmatpush1.msra.mxu0 0.0
    %218 = vmatprep.subr.mxu0 0.0
    %219 = vmatpush1.msra.mxu0 0.0
    %220 = vmatprep.subr.mxu0 0.0
    %221 = vmatpush1.msra.mxu0 0.0
    %222 = vmatprep.subr.mxu0 0.0
    %223 = vmatpush1.msra.mxu0 0.0
    %224 = vmatprep.subr.mxu0 0.0
    %225 = vmatpush1.msra.mxu0 0.0
    %226 = vmatprep.subr.mxu0 0.0
    %227 = vmatpush1.msra.mxu0 0.0
    %228 = vmatprep.subr.mxu0 0.0
    %229 = vmatpush1.msra.mxu0 0.0
    %230 = vmatprep.subr.mxu0 0.0
    %231 = vmatpush1.msra.mxu0 0.0
    %232 = vmatprep.subr.mxu0 0.0
    %233 = vmatpush1.msra.mxu0 0.0
    %234 = vmatprep.subr.mxu0 0.0
    %235 = vmatpush1.msra.mxu0 0.0
    %236 = vmatprep.subr.mxu0 0.0
    %237 = vmatpush1.msra.mxu0 0.0
    %238 = vmatprep.subr.mxu0 0.0
    %239 = vmatpush1.msra.mxu0 0.0
    %240 = vmatprep.subr.mxu0 0.0
    %241 = vmatpush1.msra.mxu0 0.0
    %242 = vmatprep.subr.mxu0 0.0
    %243 = vmatpush1.msra.mxu0 0.0
    %244 = vmatprep.subr.mxu0 0.0
    %245 = vmatpush1.msra.mxu0 0.0
    %246 = vmatprep.subr.mxu0 0.0
    %247 = vmatpush1.msra.mxu0 0.0
    %248 = vmatprep.subr.mxu0 0.0
    %249 = vmatpush1.msra.mxu0 0.0
    %250 = vmatprep.subr.mxu0 0.0
    %251 = vmatpush1.msra.mxu0 0.0
    %252 = vmatprep.mubr.f32.mxu0 0.0
    %253 = vmatmul.mubr.f32.gmra.mrb[0].mxu0 %v186
    %v254 = vpop.f32.mrb[0].mxu0
    %v255 = vadd.f32 %v183, %v254
    %v256 = vpop.f32.mrb[0].mxu0
    %257 = vdwg.mxu0
    %vm258 = vcmask 1041408
    %v259 = vsel %vm258, %v255, -inf
    %260 = vmax.xlane.f32.xlu0 %v259
    %v261 = vpop.xlane.xlu0 %260
    %v262 = vsub.f32 %v255, %v261
    %v263 = vmul.f32 %v262, 1.442695
    %v264 = vpow.pop %v263
    %v265 = vsel %vm258, %v264, 0.0
    %266 = vadd.xlane.f32.xlu0 %v265
    %v267 = vpop.xlane.xlu0 %266
    %v268 = vrcp.pop %v267
    %v269 = vmul.f32 %v264, %v268
    %270 = vst [vmem:[#allocation2] sm:$0x3] %v269
    // Predicated region
    $region14: #{textglovegnb_pallas.1} parent=1 // pred_check
      _
    $region15: #{textglovegnb_pallas.1} parent=1 // pred_check_branch
      %272 = sbr.rel (0) target = $region17
    $region16: #{textglovegnb_pallas.1} parent=1 // pred_region
      %s274 = ssub.s32 32, 32
      %275 = vsyncadd [#allocation3], %s274
      %s277 = sshll.u32 [#allocation2], 4
      %s278 = int_to_ptr.vmem [resolvable:$true] %s277
      %280 = dma.vmem_to_hbm [thread:$0]  %s278, 32, %s3, [#allocation3]
    $region17: #{textglovegnb_pallas.1} parent=1 // pred_fallthru
      _
    // Predicated region
    $region18: #{textglovegnb_pallas.1} parent=1 // pred_check
      _
    $region19: #{textglovegnb_pallas.1} parent=1 // pred_check_branch
      %282 = sbr.rel (0) target = $region21
    $region20: #{textglovegnb_pallas.1} parent=1 // pred_region
      %283 = dma.done [#allocation3], 32
    $region21: #{textglovegnb_pallas.1} parent=1 // pred_fallthru
      _
    %284 = vsyncpa [#allocation3], 1

</llo_original>
